<compile_context>
chip_gen: v7x
topology: tpu7x:2x2x1
jax: 0.10.0
libtpu: 0.0.40
codegen_flags: <defaults>
</compile_context>

<pallas_src>
import functools

import jax
import jax.numpy as jnp
from jax import lax
from jax.experimental import pallas as pl
from jax.experimental.pallas import tpu as pltpu


_SMALL_B = 512  # single-block fast-path threshold


def _round_up(x: int, m: int) -> int:
    return ((x + m - 1) // m) * m


def _vmem_capacity_bytes() -> int:
    try:
        info = pltpu.get_tpu_info()
        return int(getattr(info, "vmem_capacity_bytes", 128 * 1024 * 1024))
    except Exception:
        return 128 * 1024 * 1024


def _select_tile_and_vmem(d: int):
    """Largest 128-aligned tile whose pipeline footprint fits the chip's VMEM."""
    cap = _vmem_capacity_bytes()
    # v7x: 64 MiB VMEM per TensorCore -> stay under ~48 MiB.
    # v5e / v6e: 128 MiB physical -> allow a bigger pipeline budget.
    vmem_limit = 48 * 1024 * 1024 if cap <= 64 * 1024 * 1024 else 80 * 1024 * 1024
    budget = vmem_limit // 2
    tile = 128
    for cand in (512, 256, 128):
        inputs = 2 * 2 * cand * d * 2        # LHS + RHS tiles, double-buffered, bf16
        interm = 6 * cand * cand * 4         # cos / mask / where temporaries (f32)
        if inputs + interm <= budget:
            tile = cand
            break
    return tile, vmem_limit


# ---------------------------------------------------------------------------
# Tiled kernel: upper-triangular (i, j) tile schedule, scalar-prefetched.
# Output block (1, 4, tile) per chunk stays VMEM-resident across the
# "arbitrary" tile axis and is written back to HBM once per chunk.
# Rows: 0 = sum(1 - cos) over pos pairs, 1 = sum(relu(cos - m)) over neg pairs,
#       2 = pos pair count, 3 = neg pair count (per lane / column).
# ---------------------------------------------------------------------------
def _cos_tile_kernel(i_idx_ref, j_idx_ref, wgt_ref,      # scalar prefetch (SMEM)
                     a_ref, b_ref,                       # (tile, D) bf16 embedding tiles
                     lab_i_ref, lab_j_ref,               # (tile, 1), (1, tile) int32
                     out_ref,                            # (1, 4, tile) f32 accumulator block
                     *, tile: int, batch: int, margin: float, steps_per_chunk: int):
    t = pl.program_id(1)

    @pl.when(t == 0)
    def _():
        out_ref[...] = jnp.zeros_like(out_ref)

    flat = pl.program_id(0) * steps_per_chunk + t
    i_blk = i_idx_ref[flat]
    j_blk = j_idx_ref[flat]
    # 0 = schedule padding, 1 = diagonal tile, 2 = off-diagonal (folds the
    # mirrored (j, i) tile by symmetry of the Gram matrix and the masks).
    w = wgt_ref[flat].astype(jnp.float32)

    # MXU: bf16 inputs, f32 accumulation; contract both operands on D
    # (no explicit transpose materialized).
    cos = lax.dot_general(
        a_ref[...], b_ref[...],
        dimension_numbers=(((1,), (1,)), ((), ())),
        preferred_element_type=jnp.float32)                    # (tile, tile) f32

    # Global row/col indices: exclude padded rows/cols and the diagonal.
    row = i_blk * tile + lax.broadcasted_iota(jnp.int32, (tile, tile), 0)
    col = j_blk * tile + lax.broadcasted_iota(jnp.int32, (tile, tile), 1)
    valid = jnp.logical_and(jnp.logical_and(row < batch, col < batch), row != col)

    same = lab_i_ref[...] == lab_j_ref[...]                    # (tile, tile)
    pos_mask = jnp.logical_and(valid, same)
    neg_mask = jnp.logical_and(valid, jnp.logical_not(same))

    pos_sum = jnp.sum(jnp.where(pos_mask, 1.0 - cos, 0.0), axis=0)                 # (tile,)
    neg_sum = jnp.sum(jnp.where(neg_mask, jnp.maximum(cos - margin, 0.0), 0.0), axis=0)
    pos_cnt = jnp.sum(pos_mask.astype(jnp.float32), axis=0)
    neg_cnt = jnp.sum(neg_mask.astype(jnp.float32), axis=0)

    # Direct per-row accumulation (no concatenate / sublane shuffle).
    out_ref[0, 0, :] += w * pos_sum
    out_ref[0, 1, :] += w * neg_sum
    out_ref[0, 2, :] += w * pos_cnt
    out_ref[0, 3, :] += w * neg_cnt


# ---------------------------------------------------------------------------
# Small-B fast path: one grid step, full-array blocks, no prefetch machinery.
# ---------------------------------------------------------------------------
def _cos_small_kernel(e_ref, lab_col_ref, lab_row_ref, out_ref, *, margin: float):
    cos = lax.dot_general(
        e_ref[...], e_ref[...],
        dimension_numbers=(((1,), (1,)), ((), ())),
        preferred_element_type=jnp.float32)                    # (B, B) f32
    n = cos.shape[0]
    row = lax.broadcasted_iota(jnp.int32, (n, n), 0)
    col = lax.broadcasted_iota(jnp.int32, (n, n), 1)
    off_diag = row != col
    same = lab_col_ref[...] == lab_row_ref[...]
    pos_mask = jnp.logical_and(off_diag, same)
    neg_mask = jnp.logical_and(off_diag, jnp.logical_not(same))

    out_ref[0, 0, :] = jnp.sum(jnp.where(pos_mask, 1.0 - cos, 0.0), axis=0)
    out_ref[0, 1, :] = jnp.sum(jnp.where(neg_mask, jnp.maximum(cos - margin, 0.0), 0.0), axis=0)
    out_ref[0, 2, :] = jnp.sum(pos_mask.astype(jnp.float32), axis=0)
    out_ref[0, 3, :] = jnp.sum(neg_mask.astype(jnp.float32), axis=0)


def _finalize(out: jax.Array) -> jax.Array:
    """out: (chunks, 4, tile) partial sums / counts -> scalar loss."""
    pos_sum = jnp.sum(out[:, 0, :])
    neg_sum = jnp.sum(out[:, 1, :])
    # Per-lane counts are exact small integers stored in f32; sum them in int32
    # (exact; B*(B-1) fits int32 for B up to ~46k).
    pos_cnt = jnp.sum(out[:, 2, :].astype(jnp.int32))
    neg_cnt = jnp.sum(out[:, 3, :].astype(jnp.int32))
    pos_loss = jnp.where(pos_cnt > 0,
                         pos_sum / jnp.maximum(pos_cnt, 1).astype(jnp.float32), 0.0)
    neg_loss = jnp.where(neg_cnt > 0,
                         neg_sum / jnp.maximum(neg_cnt, 1).astype(jnp.float32), 0.0)
    return (pos_loss + neg_loss).astype(jnp.float32)


def cosine_similarity_loss(embeddings: jax.Array, labels: jax.Array,
                           margin: float = 0.5) -> jax.Array:
    """Pallas TPU implementation of CosineSimilarityLoss.forward.

    embeddings: (B, D) float  ->  matmul runs in bf16 with f32 accumulation.
    labels:     (B,)   int
    returns:    ()     float32
    """
    b, d = embeddings.shape
    labels_i32 = labels.astype(jnp.int32)
    emb_bf = embeddings.astype(jnp.bfloat16)   # bf16 MXU path, f32 accumulation

    # ---------------- small-B fast path (fine-tuning regime) ----------------
    if b <= _SMALL_B:
        lab_col = labels_i32.reshape(b, 1)
        lab_row = labels_i32.reshape(1, b)
        out = pl.pallas_call(
            functools.partial(_cos_small_kernel, margin=float(margin)),
            out_shape=jax.ShapeDtypeStruct((1, 4, b), jnp.float32),
            grid=(1,),
            in_specs=[pl.BlockSpec((b, d), lambda i: (0, 0)),
                      pl.BlockSpec((b, 1), lambda i: (0, 0)),
                      pl.BlockSpec((1, b), lambda i: (0, 0))],
            out_specs=pl.BlockSpec((1, 4, b), lambda i: (0, 0, 0)),
        )(emb_bf, lab_col, lab_row)
        return _finalize(out)

    # ---------------------------- tiled path --------------------------------
    tile, vmem_limit = _select_tile_and_vmem(d)
    padded_b = _round_up(b, tile)
    nblk = padded_b // tile

    if padded_b != b:
        emb_bf = jnp.pad(emb_bf, ((0, padded_b - b), (0, 0)))
        lab_pad = jnp.pad(labels_i32, (0, padded_b - b))
    else:
        lab_pad = labels_i32
    lab_col = lab_pad.reshape(padded_b, 1)   # labels as a column -> sublanes
    lab_row = lab_pad.reshape(1, padded_b)   # labels as a row    -> lanes

    # Upper-triangular tile schedule (i-major), split into contiguous chunks
    # so a v7x megacore "parallel" outer axis preserves LHS-block residency.
    pairs = [(i, j) for i in range(nblk) for j in range(i, nblk)]
    num_t = len(pairs)
    num_chunks = 2 if num_t >= 2 else 1
    spc = -(-num_t // num_chunks)            # steps per chunk
    total = num_chunks * spc
    pad_n = total - num_t
    i_idx = jnp.asarray([p[0] for p in pairs] + [0] * pad_n, dtype=jnp.int32)
    j_idx = jnp.asarray([p[1] for p in pairs] + [0] * pad_n, dtype=jnp.int32)
    wgt = jnp.asarray([1 if p[0] == p[1] else 2 for p in pairs] + [0] * pad_n,
                      dtype=jnp.int32)

    kernel = functools.partial(_cos_tile_kernel, tile=tile, batch=b,
                               margin=float(margin), steps_per_chunk=spc)

    out = pl.pallas_call(
        kernel,
        out_shape=jax.ShapeDtypeStruct((num_chunks, 4, tile), jnp.float32),
        grid_spec=pltpu.PrefetchScalarGridSpec(
            num_scalar_prefetch=3,
            grid=(num_chunks, spc),
            in_specs=[
                # LHS tile: depends only on i -> stays resident while j streams.
                pl.BlockSpec((tile, d), lambda c, t, ii, jj, ww: (ii[c * spc + t], 0)),
                # RHS tile: streamed per step.
                pl.BlockSpec((tile, d), lambda c, t, ii, jj, ww: (jj[c * spc + t], 0)),
                pl.BlockSpec((tile, 1), lambda c, t, ii, jj, ww: (ii[c * spc + t], 0)),
                pl.BlockSpec((1, tile), lambda c, t, ii, jj, ww: (0, jj[c * spc + t])),
            ],
            out_specs=pl.BlockSpec((1, 4, tile), lambda c, t, ii, jj, ww: (c, 0, 0)),
        ),
        compiler_params=pltpu.CompilerParams(
            dimension_semantics=("parallel", "arbitrary"),
            vmem_limit_bytes=vmem_limit,
        ),
    )(i_idx, j_idx, wgt, emb_bf, emb_bf, lab_col, lab_row)

    return _finalize(out)


def _reference(embeddings, labels, margin=0.5):
    cos = embeddings @ embeddings.T
    same = labels[None, :] == labels[:, None]
    eye = jnp.eye(embeddings.shape[0], dtype=bool)
    pos_mask = same & ~eye
    neg_mask = ~same & ~eye
    pos_cnt = pos_mask.sum()
    neg_cnt = neg_mask.sum()
    pos_loss = jnp.where(
        pos_cnt > 0,
        jnp.sum(jnp.where(pos_mask, 1.0 - cos, 0.0)) / jnp.maximum(pos_cnt, 1),
        0.0)
    neg_loss = jnp.where(
        neg_cnt > 0,
        jnp.sum(jnp.where(neg_mask, jnp.maximum(cos - margin, 0.0), 0.0))
        / jnp.maximum(neg_cnt, 1),
        0.0)
    return pos_loss + neg_loss


if __name__ == "__main__":
    key = jax.random.PRNGKey(0)
    k1, k2, k3, k4 = jax.random.split(key, 4)

    # bf16 matmul path vs. f32 reference -> loose-ish tolerance (loss-level).
    TOL = 5e-2

    # 1) Small-B fast path (typical fine-tuning batch).
    B1, D1 = 8, 32
    emb1 = jax.random.normal(k1, (B1, D1), dtype=jnp.float32)
    lab1 = jax.random.randint(k2, (B1,), 0, 3, dtype=jnp.int32)
    loss1 = jax.block_until_ready(cosine_similarity_loss(emb1, lab1, margin=0.5))
    ref1 = _reference(emb1, lab1, margin=0.5)
    assert jnp.allclose(loss1, ref1, rtol=TOL, atol=TOL), (loss1, ref1)

    # 2) Tiled upper-triangular path (multi-tile, chunked grid, padding).
    B2, D2 = 640, 64
    emb2 = jax.random.normal(k3, (B2, D2), dtype=jnp.float32)
    lab2 = jax.random.randint(k4, (B2,), 0, 8, dtype=jnp.int32)
    loss2 = jax.block_until_ready(cosine_similarity_loss(emb2, lab2, margin=0.5))
    ref2 = _reference(emb2, lab2, margin=0.5)
    assert jnp.allclose(loss2, ref2, rtol=TOL, atol=TOL), (loss2, ref2)

    print("KERNEL_OK")
</pallas_src>

<mosaic_0001>
module attributes {stable_mosaic.version = 11 : i64} {
  func.func @_cos_small_kernel(%arg0: i32, %arg1: memref<8x32xbf16, #tpu.memory_space<vmem>>, %arg2: memref<8x1xi32, #tpu.memory_space<vmem>>, %arg3: memref<1x8xi32, #tpu.memory_space<vmem>>, %arg4: memref<1x4x8xf32, #tpu.memory_space<vmem>>) attributes {dimension_semantics = [#tpu.dimension_semantics<arbitrary>], iteration_bounds = array<i64: 1>, scalar_prefetch = 0 : i64, scratch_operands = 0 : i64, tpu.core_type = #tpu.core_type<tc>, window_params = [{pipeline_mode = #tpu.pipeline_mode<synchronous>, transform_indices = @transform_0, window_bounds = array<i64: 8, 32>}, {pipeline_mode = #tpu.pipeline_mode<synchronous>, transform_indices = @transform_1, window_bounds = array<i64: 8, 1>}, {pipeline_mode = #tpu.pipeline_mode<synchronous>, transform_indices = @transform_2, window_bounds = array<i64: 1, 8>}, {pipeline_mode = #tpu.pipeline_mode<synchronous>, transform_indices = @transform_3, window_bounds = array<i64: 1, 4, 8>}]} {
    %c0 = arith.constant 0 : index
    %c0_0 = arith.constant 0 : index
    %0 = vector.load %arg1[%c0, %c0_0] : memref<8x32xbf16, #tpu.memory_space<vmem>>, vector<8x32xbf16>
    %c0_1 = arith.constant 0 : index
    %c0_2 = arith.constant 0 : index
    %1 = vector.load %arg1[%c0_1, %c0_2] : memref<8x32xbf16, #tpu.memory_space<vmem>>, vector<8x32xbf16>
    %cst = arith.constant dense<0.000000e+00> : vector<8x8xf32>
    %2 = tpu.matmul %0, %1, %cst {dimension_numbers = #tpu.dot_dimension_numbers<[1], [1], [0], [0], [0, 0, 1, 0], [], []>} : vector<8x32xbf16>, vector<8x32xbf16>, vector<8x8xf32> -> vector<8x8xf32>
    %3 = tpu.iota {dimensions = array<i32: 0>} : vector<8x8xi32>
    %4 = tpu.iota {dimensions = array<i32: 1>} : vector<8x8xi32>
    %5 = arith.cmpi ne, %3, %4 : vector<8x8xi32>
    %c0_3 = arith.constant 0 : index
    %c0_4 = arith.constant 0 : index
    %6 = vector.load %arg2[%c0_3, %c0_4] : memref<8x1xi32, #tpu.memory_space<vmem>>, vector<8x1xi32>
    %c0_5 = arith.constant 0 : index
    %c0_6 = arith.constant 0 : index
    %7 = vector.load %arg3[%c0_5, %c0_6] : memref<1x8xi32, #tpu.memory_space<vmem>>, vector<1x8xi32>
    %8 = vector.broadcast %6 : vector<8x1xi32> to vector<8x8xi32>
    %9 = vector.broadcast %7 : vector<1x8xi32> to vector<8x8xi32>
    %10 = arith.cmpi eq, %8, %9 : vector<8x8xi32>
    %11 = arith.andi %5, %10 : vector<8x8xi1>
    %cst_7 = arith.constant dense<true> : vector<8x8xi1>
    %12 = arith.xori %10, %cst_7 : vector<8x8xi1>
    %13 = arith.andi %5, %12 : vector<8x8xi1>
    %cst_8 = arith.constant 1.000000e+00 : f32
    %14 = vector.broadcast %cst_8 : f32 to vector<8x8xf32>
    %15 = arith.subf %14, %2 : vector<8x8xf32>
    %cst_9 = arith.constant 0.000000e+00 : f32
    %16 = vector.broadcast %cst_9 : f32 to vector<8x8xf32>
    %17 = arith.select %11, %15, %16 : vector<8x8xi1>, vector<8x8xf32>
    %cst_10 = arith.constant dense<0.000000e+00> : vector<8xf32>
    %18 = vector.multi_reduction <add>, %17, %cst_10 [0] : vector<8x8xf32> to vector<8xf32>
    %c0_11 = arith.constant 0 : index
    %c0_12 = arith.constant 0 : index
    %c0_13 = arith.constant 0 : index
    %19 = vector.load %arg4[%c0_11, %c0_12, %c0_13] : memref<1x4x8xf32, #tpu.memory_space<vmem>>, vector<1x1x8xf32>
    %20 = vector.shape_cast %19 : vector<1x1x8xf32> to vector<8xf32>
    %21 = vector.shape_cast %18 : vector<8xf32> to vector<1x1x8xf32>
    tpu.vector_store %arg4[%c0_11, %c0_12, %c0_13], %21 {strides = array<i32>} : memref<1x4x8xf32, #tpu.memory_space<vmem>>, vector<1x1x8xf32>,
    %cst_14 = arith.constant 5.000000e-01 : f32
    %22 = vector.broadcast %cst_14 : f32 to vector<8x8xf32>
    %23 = arith.subf %2, %22 : vector<8x8xf32>
    %cst_15 = arith.constant 0.000000e+00 : f32
    %24 = vector.broadcast %cst_15 : f32 to vector<8x8xf32>
    %25 = arith.maximumf %23, %24 : vector<8x8xf32>
    %cst_16 = arith.constant 0.000000e+00 : f32
    %26 = vector.broadcast %cst_16 : f32 to vector<8x8xf32>
    %27 = arith.select %13, %25, %26 : vector<8x8xi1>, vector<8x8xf32>
    %cst_17 = arith.constant dense<0.000000e+00> : vector<8xf32>
    %28 = vector.multi_reduction <add>, %27, %cst_17 [0] : vector<8x8xf32> to vector<8xf32>
    %c0_18 = arith.constant 0 : index
    %c1 = arith.constant 1 : index
    %c0_19 = arith.constant 0 : index
    %29 = vector.load %arg4[%c0_18, %c1, %c0_19] : memref<1x4x8xf32, #tpu.memory_space<vmem>>, vector<1x1x8xf32>
    %30 = vector.shape_cast %29 : vector<1x1x8xf32> to vector<8xf32>
    %31 = vector.shape_cast %28 : vector<8xf32> to vector<1x1x8xf32>
    tpu.vector_store %arg4[%c0_18, %c1, %c0_19], %31 {strides = array<i32>} : memref<1x4x8xf32, #tpu.memory_space<vmem>>, vector<1x1x8xf32>,
    %32 = arith.extui %11 : vector<8x8xi1> to vector<8x8xi32>
    %33 = arith.sitofp %32 : vector<8x8xi32> to vector<8x8xf32>
    %cst_20 = arith.constant dense<0.000000e+00> : vector<8xf32>
    %34 = vector.multi_reduction <add>, %33, %cst_20 [0] : vector<8x8xf32> to vector<8xf32>
    %c0_21 = arith.constant 0 : index
    %c2 = arith.constant 2 : index
    %c0_22 = arith.constant 0 : index
    %35 = vector.load %arg4[%c0_21, %c2, %c0_22] : memref<1x4x8xf32, #tpu.memory_space<vmem>>, vector<1x1x8xf32>
    %36 = vector.shape_cast %35 : vector<1x1x8xf32> to vector<8xf32>
    %37 = vector.shape_cast %34 : vector<8xf32> to vector<1x1x8xf32>
    tpu.vector_store %arg4[%c0_21, %c2, %c0_22], %37 {strides = array<i32>} : memref<1x4x8xf32, #tpu.memory_space<vmem>>, vector<1x1x8xf32>,
    %38 = arith.extui %13 : vector<8x8xi1> to vector<8x8xi32>
    %39 = arith.sitofp %38 : vector<8x8xi32> to vector<8x8xf32>
    %cst_23 = arith.constant dense<0.000000e+00> : vector<8xf32>
    %40 = vector.multi_reduction <add>, %39, %cst_23 [0] : vector<8x8xf32> to vector<8xf32>
    %c0_24 = arith.constant 0 : index
    %c3 = arith.constant 3 : index
    %c0_25 = arith.constant 0 : index
    %41 = vector.load %arg4[%c0_24, %c3, %c0_25] : memref<1x4x8xf32, #tpu.memory_space<vmem>>, vector<1x1x8xf32>
    %42 = vector.shape_cast %41 : vector<1x1x8xf32> to vector<8xf32>
    %43 = vector.shape_cast %40 : vector<8xf32> to vector<1x1x8xf32>
    tpu.vector_store %arg4[%c0_24, %c3, %c0_25], %43 {strides = array<i32>} : memref<1x4x8xf32, #tpu.memory_space<vmem>>, vector<1x1x8xf32>,
    return
  }
  func.func @transform_0(%arg0: i32) -> (i32, i32) {
    %c0_i32 = arith.constant 0 : i32
    %c0_i32_0 = arith.constant 0 : i32
    %c0_i32_1 = arith.constant 0 : i32
    return %c0_i32, %c0_i32_0 : i32, i32
  }
  func.func @transform_1(%arg0: i32) -> (i32, i32) {
    %c0_i32 = arith.constant 0 : i32
    %c0_i32_0 = arith.constant 0 : i32
    %c0_i32_1 = arith.constant 0 : i32
    return %c0_i32, %c0_i32_0 : i32, i32
  }
  func.func @transform_2(%arg0: i32) -> (i32, i32) {
    %c0_i32 = arith.constant 0 : i32
    %c0_i32_0 = arith.constant 0 : i32
    %c0_i32_1 = arith.constant 0 : i32
    return %c0_i32, %c0_i32_0 : i32, i32
  }
  func.func @transform_3(%arg0: i32) -> (i32, i32, i32) {
    %c0_i32 = arith.constant 0 : i32
    %c0_i32_0 = arith.constant 0 : i32
    %c0_i32_1 = arith.constant 0 : i32
    %c0_i32_2 = arith.constant 0 : i32
    return %c0_i32, %c0_i32_0, %c0_i32_1 : i32, i32, i32
  }
}

</mosaic_0001>

<llo_original>
// kernel: tpu_custom_call.1
$region0: #{tpu_custom_call.1}
  #allocation0 [shape = 'u32[]', space=smem, size = 0x4, offset = 0x4, fixed_abs, tag = 'smem constant byte address 0x4 - core index']
  #allocation1 [shape = 'u32[144,128]{1,0:T(1,128)}', space=vmem, size = 0x12000, scoped, tag = 'internal scratch']
  %s0 = inlined_call_operand.vmem [shape: bf16[8,32], index: 0, kind: input, shape index: {}]
  %s1 = inlined_call_operand.vmem [shape: s32[8,1], index: 1, kind: input, shape index: {}]
  %s2 = inlined_call_operand.vmem [shape: s32[1,8], index: 2, kind: input, shape index: {}]
  %s3 = inlined_call_operand.hbm [shape: f32[1,4,8], index: 3, kind: output, shape index: {}]
  %s4 = sld [smem:[#allocation0]]
  $region22: #{tpu_custom_call.1} parent=0
    _
  %s6 = ssub.s32 1, %s4
  %s7 = scalar_select 0, %s6, %s4
  $region1: #{tpu_custom_call.1} parent=0
    #allocation2 [shape = 'u8[2048]{0}', space=vmem, size = 0x800, scoped, tag = 'output window, operand 0, single buffered']
    #allocation3 [shape = 's32[1]{0}', space=sflag, size = 0x4, scoped, tag = 'scoped memory for tpu_custom_call.1']
    %8 = vsyncpa [#allocation3], 0
    // Predicated region
    $region2: #{tpu_custom_call.1} parent=1 // pred_check
      _
    $region3: #{tpu_custom_call.1} parent=1 // pred_check_branch
      %10 = sbr.rel (0) target = $region5
    $region4: #{tpu_custom_call.1} parent=1 // pred_region
      _
    $region5: #{tpu_custom_call.1} parent=1 // pred_fallthru
      _
    // Predicated region
    $region6: #{tpu_custom_call.1} parent=1 // pred_check
      _
    $region7: #{tpu_custom_call.1} parent=1 // pred_check_branch
      %12 = sbr.rel (0) target = $region9
    $region8: #{tpu_custom_call.1} parent=1 // pred_region
      _
    $region9: #{tpu_custom_call.1} parent=1 // pred_fallthru
      _
    // Predicated region
    $region10: #{tpu_custom_call.1} parent=1 // pred_check
      _
    $region11: #{tpu_custom_call.1} parent=1 // pred_check_branch
      %14 = sbr.rel (0) target = $region13
    $region12: #{tpu_custom_call.1} parent=1 // pred_region
      _
    $region13: #{tpu_custom_call.1} parent=1 // pred_fallthru
      _
    %v16 = vld [vmem:[%s0] sm:$0xf]
    %vm17 = vcmask 261120
    %v19 = vsel %vm17, %v16, 0
    %21 = vmatprep.subr.bf16.mxu0 0
    %22 = vmatpush1.bf16.xpose.msra.mxu0 %v19
    %23 = vmatprep.subr.bf16.mxu0 0
    %24 = vmatpush1.bf16.xpose.msra.mxu0 0
    %25 = vmatprep.subr.bf16.mxu0 0
    %26 = vmatpush1.bf16.xpose.msra.mxu0 0
    %27 = vmatprep.subr.bf16.mxu0 0
    %28 = vmatpush1.bf16.xpose.msra.mxu0 0
    %29 = vmatprep.subr.bf16.mxu0 0
    %30 = vmatpush1.bf16.xpose.msra.mxu0 0
    %31 = vmatprep.subr.bf16.mxu0 0
    %32 = vmatpush1.bf16.xpose.msra.mxu0 0
    %33 = vmatprep.subr.bf16.mxu0 0
    %34 = vmatpush1.bf16.xpose.msra.mxu0 0
    %35 = vmatprep.subr.bf16.mxu0 0
    %36 = vmatpush1.bf16.xpose.msra.mxu0 0
    %37 = vmatprep.subr.bf16.mxu0 0
    %38 = vmatpush1.bf16.xpose.msra.mxu0 0
    %39 = vmatprep.subr.bf16.mxu0 0
    %40 = vmatpush1.bf16.xpose.msra.mxu0 0
    %41 = vmatprep.subr.bf16.mxu0 0
    %42 = vmatpush1.bf16.xpose.msra.mxu0 0
    %43 = vmatprep.subr.bf16.mxu0 0
    %44 = vmatpush1.bf16.xpose.msra.mxu0 0
    %45 = vmatprep.subr.bf16.mxu0 0
    %46 = vmatpush1.bf16.xpose.msra.mxu0 0
    %47 = vmatprep.subr.bf16.mxu0 0
    %48 = vmatpush1.bf16.xpose.msra.mxu0 0
    %49 = vmatprep.subr.bf16.mxu0 0
    %50 = vmatpush1.bf16.xpose.msra.mxu0 0
    %51 = vmatprep.subr.bf16.mxu0 0
    %52 = vmatpush1.bf16.xpose.msra.mxu0 0
    %53 = vmatprep.mubr.bf16.mxu0 0
    %54 = vmatmul.mubr.bf16.gmra.mrb[0].mxu0 %v19
    %v55 = vpop.f32.mrb[0].mxu0
    %v56 = vadd.f32 0.0, %v55
    %v57 = vpop.f32.mrb[0].mxu0
    %v58 = vpop.f32.mrb[0].mxu0
    %v59 = vpop.f32.mrb[0].mxu0
    %60 = vdwg.mxu0
    %v61 = vlaneseq
    %v62 = vshrl.u32 %v61, 7
    %v63 = vlaneseq
    %v64 = vand.u32 %v63, 127
    %vm65 = vcmp.ne.s32.totalorder %v62, %v64
    %v66 = vld [vmem:[%s1] sm:$0xff]
    %v67 = vld [vmem:[%s2] sm:$0x1]
    %68 = vset.pattern.permute.xlu0 0
    %69 = vperm.xlu0 %68, %v66
    %v70 = vpop.permute.xlu0 %69
    %v71 = vlaneseq
    %v72 = vshrl.u32 %v71, 7
    %v73 = vsub.s32 0, %v72
    %v74 = vrot.slane %v67, %v73
    %vm75 = vcmp.eq.s32.totalorder %v70, %v74
    %vm76 = vmand %vm65, %vm75
    %vm77 = vmxor %vm75, 1
    %vm78 = vmand %vm65, %vm77
    %v79 = vsub.f32 1.0, %v56
    %v80 = vsel %vm76, %v79, 0.0
    %vm81 = vcmask 64512
    %v82 = vsel %vm81, %v80, 0.0
    %v83 = vrot.slane %v82, 4
    %v84 = vadd.f32 %v82, %v83
    %v85 = vrot.slane %v84, 2
    %v86 = vadd.f32 %v84, %v85
    %v87 = vrot.slane %v86, 1
    %v88 = vadd.f32 %v86, %v87
    %vm89 = vcmask 57344
    %90 = vst.msk [vmem:[#allocation2] sm:$0x1] %vm89, %v88
    %v91 = vsub.f32 %v56, 0.5
    %v92 = vmax.f32 %v91, 0.0
    %v93 = vsel %vm78, %v92, 0.0
    %v94 = vsel %vm81, %v93, 0.0
    %v95 = vrot.slane %v94, 4
    %v96 = vadd.f32 %v94, %v95
    %v97 = vrot.slane %v96, 2
    %v98 = vadd.f32 %v96, %v97
    %v99 = vrot.slane %v98, 1
    %v100 = vadd.f32 %v98, %v99
    %101 = vst.msk [vmem:[#allocation2 + $0x1] sm:$0x1] %vm89, %v100
    %v102 = vsel %vm76, 1, 0
    %v103 = vcvt.s32.f32 %v102
    %v104 = vsel %vm81, %v103, 0.0
    %v105 = vrot.slane %v104, 4
    %v106 = vadd.f32 %v104, %v105
    %v107 = vrot.slane %v106, 2
    %v108 = vadd.f32 %v106, %v107
    %v109 = vrot.slane %v108, 1
    %v110 = vadd.f32 %v108, %v109
    %111 = vst.msk [vmem:[#allocation2 + $0x2] sm:$0x1] %vm89, %v110
    %v112 = vsel %vm78, 1, 0
    %v113 = vcvt.s32.f32 %v112
    %v114 = vsel %vm81, %v113, 0.0
    %v115 = vrot.slane %v114, 4
    %v116 = vadd.f32 %v114, %v115
    %v117 = vrot.slane %v116, 2
    %v118 = vadd.f32 %v116, %v117
    %v119 = vrot.slane %v118, 1
    %v120 = vadd.f32 %v118, %v119
    %121 = vst.msk [vmem:[#allocation2 + $0x3] sm:$0x1] %vm89, %v120
    // Predicated region
    $region14: #{tpu_custom_call.1} parent=1 // pred_check
      _
    $region15: #{tpu_custom_call.1} parent=1 // pred_check_branch
      %123 = sbr.rel (0) target = $region17
    $region16: #{tpu_custom_call.1} parent=1 // pred_region
      %s125 = ssub.s32 64, 64
      %126 = vsyncadd [#allocation3], %s125
      %s128 = sshll.u32 [#allocation2], 4
      %s129 = int_to_ptr.vmem [resolvable:$true] %s128
      %131 = dma.vmem_to_hbm [thread:$0]  %s129, 64, %s3, [#allocation3]
    $region17: #{tpu_custom_call.1} parent=1 // pred_fallthru
      _
    // Predicated region
    $region18: #{tpu_custom_call.1} parent=1 // pred_check
      _
    $region19: #{tpu_custom_call.1} parent=1 // pred_check_branch
      %133 = sbr.rel (0) target = $region21
    $region20: #{tpu_custom_call.1} parent=1 // pred_region
      %134 = dma.done [#allocation3], 64
    $region21: #{tpu_custom_call.1} parent=1 // pred_fallthru
      _
    %135 = vsyncpa [#allocation3], 1

</llo_original>
